<compile_context>
chip_gen: v6e
topology: v6e:2x2x1
jax: 0.10.0
libtpu: 0.0.40
codegen_flags: <defaults>
</compile_context>

<pallas_src>
import functools

import jax
import jax.numpy as jnp
from jax.experimental import pallas as pl
from jax.experimental.pallas import tpu as pltpu


def _round_up(x: int, m: int) -> int:
    return ((x + m - 1) // m) * m


def _pad_and_tile(dim: int, base: int, tile_max: int):
    """Pad `dim` to a multiple of `base`; pick a tile <= tile_max dividing it."""
    d = _round_up(dim, base)
    if d <= tile_max:
        return d, d
    d = _round_up(d, tile_max)
    return d, tile_max


# ----------------------------------------------------------------------------
# Kernels.  Weights carry the conjugate sign already folded into Ai, so both
# the A^H and A^T paths use the same body:
#     Zr = Yr @ Ar + Yi @ Ai_s
#     Zi = Yi @ Ar - Yr @ Ai_s
# ----------------------------------------------------------------------------
def _resident_m_kernel(yr_ref, yi_ref, wr_ref, wi_ref, zr_ref, zi_ref):
    """Whole reduction dim (M) resident: one pass, no accumulator scratch.

    Four small MXU dots reuse the same Ar / Ai tiles already in VMEM, so the
    dominant (weight) HBM stream is 2*M*N floats instead of 4*M*N.
    """
    yr = yr_ref[...]
    yi = yi_ref[...]
    wr = wr_ref[...]
    wi = wi_ref[...]
    zr_ref[...] = (jnp.dot(yr, wr, preferred_element_type=jnp.float32)
                   + jnp.dot(yi, wi, preferred_element_type=jnp.float32))
    zi_ref[...] = (jnp.dot(yi, wr, preferred_element_type=jnp.float32)
                   - jnp.dot(yr, wi, preferred_element_type=jnp.float32))


def _tiled_k_kernel(yr_ref, yi_ref, wr_ref, wi_ref, zr_ref, zi_ref):
    """K-tiled reduction (k is the LAST grid axis).

    Accumulates directly into the f32 output blocks (their BlockSpec index is
    invariant over k), so no VMEM accumulator scratch and no finalize copy.
    """
    @pl.when(pl.program_id(2) == 0)
    def _init():
        zr_ref[...] = jnp.zeros_like(zr_ref)
        zi_ref[...] = jnp.zeros_like(zi_ref)

    yr = yr_ref[...]
    yi = yi_ref[...]
    wr = wr_ref[...]
    wi = wi_ref[...]
    zr_ref[...] += (jnp.dot(yr, wr, preferred_element_type=jnp.float32)
                    + jnp.dot(yi, wi, preferred_element_type=jnp.float32))
    zi_ref[...] += (jnp.dot(yi, wr, preferred_element_type=jnp.float32)
                    - jnp.dot(yr, wi, preferred_element_type=jnp.float32))


# ----------------------------------------------------------------------------
# Jitted apply: only y-dependent work (real/imag split, pad, pallas_call,
# slice, complex recombine).  Weight arrays come in already padded/cast.
# ----------------------------------------------------------------------------
@functools.partial(
    jax.jit,
    static_argnames=("n_out", "tk", "tn", "reduce_k", "compute_dtype"))
def _adjoint_matvec(y, wr, wi, *, n_out, tk, tn, reduce_k, compute_dtype):
    B, C, M = y.shape
    P = B * C
    Mp, Nh = wr.shape  # padded reduction / padded output lanes

    p_base = 8 if compute_dtype == jnp.float32 else 16  # bf16 packs 2 rows/sublane
    Pp, tp = _pad_and_tile(P, p_base, 256)

    yr = jnp.real(y).reshape(P, M).astype(compute_dtype)
    yi = jnp.imag(y).reshape(P, M).astype(compute_dtype)
    if Pp != P or Mp != M:
        yr = jnp.pad(yr, ((0, Pp - P), (0, Mp - M)))
        yi = jnp.pad(yi, ((0, Pp - P), (0, Mp - M)))

    itemsize = jnp.dtype(compute_dtype).itemsize
    cost = pl.CostEstimate(
        flops=2 * 4 * Pp * Mp * Nh,                      # 4 real dots
        transcendentals=0,
        bytes_accessed=(2 * Pp * Mp + 2 * Mp * Nh) * itemsize + 2 * Pp * Nh * 4)

    out_shape = (jax.ShapeDtypeStruct((Pp, Nh), jnp.float32),
                 jax.ShapeDtypeStruct((Pp, Nh), jnp.float32))

    if not reduce_k:
        # M resident in every block; j varies fastest so for a single i-tile
        # (the common small-batch case) each weight block is DMA'd exactly once.
        grid = (Pp // tp, Nh // tn)
        in_specs = [
            pl.BlockSpec((tp, Mp), lambda i, j: (i, 0)),
            pl.BlockSpec((tp, Mp), lambda i, j: (i, 0)),
            pl.BlockSpec((Mp, tn), lambda i, j: (0, j)),
            pl.BlockSpec((Mp, tn), lambda i, j: (0, j)),
        ]
        out_specs = [
            pl.BlockSpec((tp, tn), lambda i, j: (i, j)),
            pl.BlockSpec((tp, tn), lambda i, j: (i, j)),
        ]
        kernel = _resident_m_kernel
        dims = ("parallel", "parallel")
    else:
        grid = (Pp // tp, Nh // tn, Mp // tk)
        in_specs = [
            pl.BlockSpec((tp, tk), lambda i, j, k: (i, k)),
            pl.BlockSpec((tp, tk), lambda i, j, k: (i, k)),
            pl.BlockSpec((tk, tn), lambda i, j, k: (k, j)),
            pl.BlockSpec((tk, tn), lambda i, j, k: (k, j)),
        ]
        out_specs = [
            pl.BlockSpec((tp, tn), lambda i, j, k: (i, j)),
            pl.BlockSpec((tp, tn), lambda i, j, k: (i, j)),
        ]
        kernel = _tiled_k_kernel
        dims = ("parallel", "parallel", "arbitrary")

    zr_p, zi_p = pl.pallas_call(
        kernel,
        out_shape=out_shape,
        grid_spec=pltpu.PrefetchScalarGridSpec(
            num_scalar_prefetch=0,
            grid=grid,
            in_specs=in_specs,
            out_specs=out_specs,
        ),
        compiler_params=pltpu.CompilerParams(
            dimension_semantics=dims,
            vmem_limit_bytes=32 * 1024 * 1024),
        cost_estimate=cost,
    )(yr, yi, wr, wi)

    # Both slices start at a 128-lane-aligned column (0); only the tail is cut.
    zr = zr_p[:P, :n_out]
    zi = zi_p[:P, :n_out]
    return jax.lax.complex(zr, zi).reshape(B, C, n_out)


# ----------------------------------------------------------------------------
# Operator factory: all weight prep cached here, done once per operator A.
# ----------------------------------------------------------------------------
def make_adjoint_operator(A, *, conjugate: bool = True,
                          compute_dtype=jnp.float32,
                          max_resident_m: int = 1024):
    """Return a callable y -> A^H @ y (conjugate=True) or A^T @ y (False).

    A: complex [M, N]; y: complex [B, C, M]; result: complex64 [B, C, N].
    Weight prep (real/imag split, sign fold, pad, cast) runs once here.
    `compute_dtype=jnp.bfloat16` halves the weight HBM stream (f32 accumulate),
    but may not hold a 1e-4 tolerance -> kept opt-in.
    """
    M, N = A.shape

    # Output lane padding: each of Zr / Zi padded to a 128-lane boundary so the
    # epilogue slices are vreg-aligned.  When N > 128 prefer >= 2 j-tiles so
    # both v7x TensorCores get work even when P = B*C is tiny.
    tn_cap = 512
    if _round_up(N, 128) > 128:
        tn_cap = max(128, min(512, _round_up(N, 256) // 2))
    Nh, tn = _pad_and_tile(N, 128, tn_cap)

    reduce_k = _round_up(M, 128) > max_resident_m
    if reduce_k:
        tk_cap = max(128, min(512, max_resident_m))
        Mp, tk = _pad_and_tile(M, 128, tk_cap)
    else:
        Mp = _round_up(M, 128)
        tk = Mp

    ar = jnp.real(A).astype(jnp.float32)
    ai = jnp.imag(A).astype(jnp.float32)
    ai = ai if conjugate else -ai                    # fold conjugate sign into Ai
    wr = jnp.pad(ar, ((0, Mp - M), (0, Nh - N))).astype(compute_dtype)
    wi = jnp.pad(ai, ((0, Mp - M), (0, Nh - N))).astype(compute_dtype)

    def apply(y):
        return _adjoint_matvec(y, wr, wi, n_out=N, tk=tk, tn=tn,
                               reduce_k=reduce_k, compute_dtype=compute_dtype)

    return apply


def adjoint_apply(y, A, *, conjugate: bool = True, compute_dtype=jnp.float32):
    """One-shot convenience (re-does weight prep each call).  Prefer
    make_adjoint_operator for repeated forward calls."""
    return make_adjoint_operator(A, conjugate=conjugate,
                                 compute_dtype=compute_dtype)(y)


if __name__ == "__main__":
    key = jax.random.PRNGKey(0)
    k_ar, k_ai, k_yr, k_yi = jax.random.split(key, 4)

    B, C = 2, 4          # batch, channel
    M, N = 16, 32        # base operator: input dim N -> output dim M

    A = (jax.random.normal(k_ar, (M, N), dtype=jnp.float32)
         + 1j * jax.random.normal(k_ai, (M, N), dtype=jnp.float32)).astype(jnp.complex64)
    y = (jax.random.normal(k_yr, (B, C, M), dtype=jnp.float32)
         + 1j * jax.random.normal(k_yi, (B, C, M), dtype=jnp.float32)).astype(jnp.complex64)

    # ConjugateTransposeLinearOperator.forward: z = A^H y
    conj_op = make_adjoint_operator(A, conjugate=True)
    z = jax.block_until_ready(conj_op(y))
    z_ref = jnp.einsum("bcm,mn->bcn", y, jnp.conj(A))
    assert z.shape == (B, C, N) and z.dtype == jnp.complex64
    assert jnp.allclose(z, z_ref, atol=1e-4, rtol=1e-4)

    # TransposeLinearOperator.forward: z = A^T y
    trans_op = make_adjoint_operator(A, conjugate=False)
    zt = jax.block_until_ready(trans_op(y))
    zt_ref = jnp.einsum("bcm,mn->bcn", y, A)
    assert jnp.allclose(zt, zt_ref, atol=1e-4, rtol=1e-4)

    # Medium operator: exercises the lane-aligned Zr/Zi split and the >=2
    # parallel j-tiles layout (keeps both v7x TensorCores busy).
    kb1, kb2, kb3, kb4 = jax.random.split(jax.random.PRNGKey(1), 4)
    M2, N2 = 384, 192
    A2 = (jax.random.normal(kb1, (M2, N2), dtype=jnp.float32)
          + 1j * jax.random.normal(kb2, (M2, N2), dtype=jnp.float32)).astype(jnp.complex64)
    y2 = (jax.random.normal(kb3, (B, C, M2), dtype=jnp.float32)
          + 1j * jax.random.normal(kb4, (B, C, M2), dtype=jnp.float32)).astype(jnp.complex64)
    z2_ref = jnp.einsum("bcm,mn->bcn", y2, jnp.conj(A2))

    op2 = make_adjoint_operator(A2, conjugate=True)
    z2 = jax.block_until_ready(op2(y2))
    assert jnp.allclose(z2, z2_ref, atol=1e-3, rtol=1e-3)

    # Same operator, forced onto the K-tiled reduction grid (multi-step k axis
    # with direct accumulation into the output blocks).
    op2_tiled = make_adjoint_operator(A2, conjugate=True, max_resident_m=128)
    z2t = jax.block_until_ready(op2_tiled(y2))
    assert jnp.allclose(z2t, z2_ref, atol=1e-3, rtol=1e-3)

    print("KERNEL_OK")
</pallas_src>

<mosaic_0001>
module attributes {stable_mosaic.version = 11 : i64} {
  func.func @_resident_m_kernel(%arg0: i32, %arg1: i32, %arg2: memref<8x128xf32, #tpu.memory_space<vmem>>, %arg3: memref<8x128xf32, #tpu.memory_space<vmem>>, %arg4: memref<128x128xf32, #tpu.memory_space<vmem>>, %arg5: memref<128x128xf32, #tpu.memory_space<vmem>>, %arg6: memref<8x128xf32, #tpu.memory_space<vmem>>, %arg7: memref<8x128xf32, #tpu.memory_space<vmem>>) attributes {dimension_semantics = [#tpu.dimension_semantics<parallel>, #tpu.dimension_semantics<parallel>], iteration_bounds = array<i64: 1, 1>, scalar_prefetch = 0 : i64, scratch_operands = 0 : i64, tpu.core_type = #tpu.core_type<tc>, window_params = [{transform_indices = @transform_0, window_bounds = array<i64: 8, 128>}, {transform_indices = @transform_1, window_bounds = array<i64: 8, 128>}, {transform_indices = @transform_2, window_bounds = array<i64: 128, 128>}, {transform_indices = @transform_3, window_bounds = array<i64: 128, 128>}, {transform_indices = @transform_4, window_bounds = array<i64: 8, 128>}, {transform_indices = @transform_5, window_bounds = array<i64: 8, 128>}]} {
    %c0 = arith.constant 0 : index
    %c0_0 = arith.constant 0 : index
    %0 = vector.load %arg2[%c0, %c0_0] : memref<8x128xf32, #tpu.memory_space<vmem>>, vector<8x128xf32>
    %c0_1 = arith.constant 0 : index
    %c0_2 = arith.constant 0 : index
    %1 = vector.load %arg3[%c0_1, %c0_2] : memref<8x128xf32, #tpu.memory_space<vmem>>, vector<8x128xf32>
    %c0_3 = arith.constant 0 : index
    %c0_4 = arith.constant 0 : index
    %2 = vector.load %arg4[%c0_3, %c0_4] : memref<128x128xf32, #tpu.memory_space<vmem>>, vector<128x128xf32>
    %c0_5 = arith.constant 0 : index
    %c0_6 = arith.constant 0 : index
    %3 = vector.load %arg5[%c0_5, %c0_6] : memref<128x128xf32, #tpu.memory_space<vmem>>, vector<128x128xf32>
    %cst = arith.constant dense<0.000000e+00> : vector<8x128xf32>
    %4 = tpu.matmul %0, %2, %cst {dimension_numbers = #tpu.dot_dimension_numbers<[1], [0], [0], [1], [0, 0, 1, 1], [], []>} : vector<8x128xf32>, vector<128x128xf32>, vector<8x128xf32> -> vector<8x128xf32>
    %cst_7 = arith.constant dense<0.000000e+00> : vector<8x128xf32>
    %5 = tpu.matmul %1, %3, %cst_7 {dimension_numbers = #tpu.dot_dimension_numbers<[1], [0], [0], [1], [0, 0, 1, 1], [], []>} : vector<8x128xf32>, vector<128x128xf32>, vector<8x128xf32> -> vector<8x128xf32>
    %6 = arith.addf %4, %5 : vector<8x128xf32>
    %c0_8 = arith.constant 0 : index
    %c0_9 = arith.constant 0 : index
    %7 = vector.load %arg6[%c0_8, %c0_9] : memref<8x128xf32, #tpu.memory_space<vmem>>, vector<8x128xf32>
    tpu.vector_store %arg6[%c0_8, %c0_9], %6 {strides = array<i32>} : memref<8x128xf32, #tpu.memory_space<vmem>>, vector<8x128xf32>,
    %cst_10 = arith.constant dense<0.000000e+00> : vector<8x128xf32>
    %8 = tpu.matmul %1, %2, %cst_10 {dimension_numbers = #tpu.dot_dimension_numbers<[1], [0], [0], [1], [0, 0, 1, 1], [], []>} : vector<8x128xf32>, vector<128x128xf32>, vector<8x128xf32> -> vector<8x128xf32>
    %cst_11 = arith.constant dense<0.000000e+00> : vector<8x128xf32>
    %9 = tpu.matmul %0, %3, %cst_11 {dimension_numbers = #tpu.dot_dimension_numbers<[1], [0], [0], [1], [0, 0, 1, 1], [], []>} : vector<8x128xf32>, vector<128x128xf32>, vector<8x128xf32> -> vector<8x128xf32>
    %10 = arith.subf %8, %9 : vector<8x128xf32>
    %c0_12 = arith.constant 0 : index
    %c0_13 = arith.constant 0 : index
    %11 = vector.load %arg7[%c0_12, %c0_13] : memref<8x128xf32, #tpu.memory_space<vmem>>, vector<8x128xf32>
    tpu.vector_store %arg7[%c0_12, %c0_13], %10 {strides = array<i32>} : memref<8x128xf32, #tpu.memory_space<vmem>>, vector<8x128xf32>,
    return
  }
  func.func @transform_0(%arg0: i32, %arg1: i32) -> (i32, i32) {
    %c0_i32 = arith.constant 0 : i32
    %c0_i32_0 = arith.constant 0 : i32
    return %arg0, %c0_i32 : i32, i32
  }
  func.func @transform_1(%arg0: i32, %arg1: i32) -> (i32, i32) {
    %c0_i32 = arith.constant 0 : i32
    %c0_i32_0 = arith.constant 0 : i32
    return %arg0, %c0_i32 : i32, i32
  }
  func.func @transform_2(%arg0: i32, %arg1: i32) -> (i32, i32) {
    %c0_i32 = arith.constant 0 : i32
    %c0_i32_0 = arith.constant 0 : i32
    return %c0_i32, %arg1 : i32, i32
  }
  func.func @transform_3(%arg0: i32, %arg1: i32) -> (i32, i32) {
    %c0_i32 = arith.constant 0 : i32
    %c0_i32_0 = arith.constant 0 : i32
    return %c0_i32, %arg1 : i32, i32
  }
  func.func @transform_4(%arg0: i32, %arg1: i32) -> (i32, i32) {
    %c0_i32 = arith.constant 0 : i32
    return %arg0, %arg1 : i32, i32
  }
  func.func @transform_5(%arg0: i32, %arg1: i32) -> (i32, i32) {
    %c0_i32 = arith.constant 0 : i32
    return %arg0, %arg1 : i32, i32
  }
}

</mosaic_0001>

<llo_original>
// kernel: custom-call.1
$region0: #{custom-call.1}
  %s0 = inlined_call_operand.hbm [shape: c64[2,4,16], index: 0, kind: input, shape index: {}]
  %s1 = inlined_call_operand.vmem [shape: f32[2,4,16], index: 1, kind: output, shape index: {}]
  %s2 = scalar_lea.hbm %s0, 128
  $region1: #{custom-call.1} parent=0
    #allocation0 [shape = 's32[1]{0}', space=sflag, size = 0x4, scoped, tag = 'scoped memory for custom-call.1']
    %3 = vsyncpa [#allocation0], 0
    %s4 = sshll.u32 %s1, 4
    %s5 = int_to_ptr.vmem [resolvable:$true] %s4
    %7 = dma.hbm_to_vmem [thread:$0]  %s2, 128, %s5, [#allocation0]
    %8 = dma.done [#allocation0], 128
    %9 = vsyncpa [#allocation0], 1

// kernel: custom-call
$region0: #{custom-call}
  %s0 = inlined_call_operand.hbm [shape: c64[2,4,16], index: 0, kind: input, shape index: {}]
  %s1 = inlined_call_operand.vmem [shape: f32[2,4,16], index: 1, kind: output, shape index: {}]
  $region1: #{custom-call} parent=0
    #allocation0 [shape = 's32[1]{0}', space=sflag, size = 0x4, scoped, tag = 'scoped memory for custom-call']
    %2 = vsyncpa [#allocation0], 0
    %s3 = sshll.u32 %s1, 4
    %s4 = int_to_ptr.vmem [resolvable:$true] %s3
    %6 = dma.hbm_to_vmem [thread:$0]  %s0, 128, %s4, [#allocation0]
    %7 = dma.done [#allocation0], 128
    %8 = vsyncpa [#allocation0], 1

// kernel: custom-call.2
$region0: #{custom-call.2}
  %s0 = inlined_call_operand.vmem [shape: f32[2,4,32], index: 0, kind: input, shape index: {}]
  %s1 = inlined_call_operand.vmem [shape: f32[2,4,32], index: 1, kind: input, shape index: {}]
  %s2 = inlined_call_operand.hbm [shape: c64[2,4,32], index: 2, kind: output, shape index: {}]
  %s3 = scalar_lea.hbm %s2, 128
  $region1: #{custom-call.2} parent=0
    #allocation0 [shape = 's32[1]{0}', space=sflag, size = 0x4, scoped, tag = 'scoped memory for custom-call.2']
    %4 = vsyncpa [#allocation0], 0
    %s5 = sshll.u32 %s0, 4
    %s6 = int_to_ptr.vmem [resolvable:$true] %s5
    %8 = dma.vmem_to_hbm [thread:$0]  %s6, 128, %s2, [#allocation0]
    %9 = dma.done [#allocation0], 128
    %10 = vsyncpa [#allocation0], 1
  $region2: #{custom-call.2} parent=0
    #allocation1 [shape = 's32[1]{0}', space=sflag, size = 0x4, scoped, tag = 'scoped memory for custom-call.2']
    %11 = vsyncpa [#allocation1], 0
    %s12 = sshll.u32 %s1, 4
    %s13 = int_to_ptr.vmem [resolvable:$true] %s12
    %15 = dma.vmem_to_hbm [thread:$0]  %s13, 128, %s3, [#allocation1]
    %16 = dma.done [#allocation1], 128
    %17 = vsyncpa [#allocation1], 1

// kernel: _adjoint_matvec.1
$region0: #{_adjoint_matvec.1}
  #allocation0 [shape = 'u32[]', space=smem, size = 0x4, offset = 0x4, fixed_abs, tag = 'smem constant byte address 0x4 - core index']
  #allocation1 [shape = 'u32[144,128]{1,0:T(1,128)}', space=vmem, size = 0x12000, scoped, tag = 'internal scratch']
  %s0 = inlined_call_operand.vmem [shape: f32[8,128], index: 0, kind: input, shape index: {}]
  %s1 = inlined_call_operand.vmem [shape: f32[8,128], index: 1, kind: input, shape index: {}]
  %s2 = inlined_call_operand.hbm [shape: f32[128,128], index: 2, kind: input, shape index: {}]
  %s3 = inlined_call_operand.hbm [shape: f32[128,128], index: 3, kind: input, shape index: {}]
  %s4 = inlined_call_operand.vmem [shape: f32[8,128], index: 4, kind: output, shape index: {0}]
  %s5 = inlined_call_operand.vmem [shape: f32[8,128], index: 5, kind: output, shape index: {1}]
  %6 = xla_tuple %s4, %s5
  %s7 = sld [smem:[#allocation0]]
  $region42: #{_adjoint_matvec.1} parent=0
    _
  %s9 = ssub.s32 1, %s7
  %s10 = scalar_select 0, %s9, %s7
  $region1: #{_adjoint_matvec.1} parent=0
    #allocation2 [shape = 'u8[65536]{0}', space=vmem, size = 0x10000, scoped, tag = 'input window, operand 2, single buffered']
    #allocation3 [shape = 's32[1]{0}', space=sflag, size = 0x4, scoped, tag = 'scoped memory for _adjoint_matvec.1']
    #allocation4 [shape = 'u8[65536]{0}', space=vmem, size = 0x10000, scoped, tag = 'input window, operand 3, single buffered']
    #allocation5 [shape = 's32[1]{0}', space=sflag, size = 0x4, scoped, tag = 'scoped memory for _adjoint_matvec.1']
    %11 = vsyncpa [#allocation3], 0
    %12 = vsyncpa [#allocation5], 0
    // Predicated region
    $region2: #{_adjoint_matvec.1} parent=1 // pred_check
      _
    $region3: #{_adjoint_matvec.1} parent=1 // pred_check_branch
      %14 = sbr.rel (0) target = $region5
    $region4: #{_adjoint_matvec.1} parent=1 // pred_region
      _
    $region5: #{_adjoint_matvec.1} parent=1 // pred_fallthru
      _
    // Predicated region
    $region6: #{_adjoint_matvec.1} parent=1 // pred_check
      _
    $region7: #{_adjoint_matvec.1} parent=1 // pred_check_branch
      %16 = sbr.rel (0) target = $region9
    $region8: #{_adjoint_matvec.1} parent=1 // pred_region
      _
    $region9: #{_adjoint_matvec.1} parent=1 // pred_fallthru
      _
    // Predicated region
    $region10: #{_adjoint_matvec.1} parent=1 // pred_check
      _
    $region11: #{_adjoint_matvec.1} parent=1 // pred_check_branch
      %18 = sbr.rel (0) target = $region13
    $region12: #{_adjoint_matvec.1} parent=1 // pred_region
      %s20 = ssub.s32 2048, 2048
      %21 = vsyncadd [#allocation3], %s20
      %s22 = sshll.u32 [#allocation2], 4
      %s23 = int_to_ptr.vmem [resolvable:$true] %s22
      %28 = dma.hbm_to_vmem [thread:$0]  %s2, 2048, %s23, [#allocation3], 128, 128, 8
    $region13: #{_adjoint_matvec.1} parent=1 // pred_fallthru
      _
    // Predicated region
    $region14: #{_adjoint_matvec.1} parent=1 // pred_check
      _
    $region15: #{_adjoint_matvec.1} parent=1 // pred_check_branch
      %30 = sbr.rel (0) target = $region17
    $region16: #{_adjoint_matvec.1} parent=1 // pred_region
      %s32 = ssub.s32 2048, 2048
      %33 = vsyncadd [#allocation5], %s32
      %s34 = sshll.u32 [#allocation4], 4
      %s35 = int_to_ptr.vmem [resolvable:$true] %s34
      %40 = dma.hbm_to_vmem [thread:$0]  %s3, 2048, %s35, [#allocation5], 128, 128, 8
    $region17: #{_adjoint_matvec.1} parent=1 // pred_fallthru
      _
    // Predicated region
    $region18: #{_adjoint_matvec.1} parent=1 // pred_check
      _
    $region19: #{_adjoint_matvec.1} parent=1 // pred_check_branch
      %42 = sbr.rel (0) target = $region21
    $region20: #{_adjoint_matvec.1} parent=1 // pred_region
      %43 = dma.done [#allocation3], 2048
    $region21: #{_adjoint_matvec.1} parent=1 // pred_fallthru
      _
    // Predicated region
    $region22: #{_adjoint_matvec.1} parent=1 // pred_check
      _
    $region23: #{_adjoint_matvec.1} parent=1 // pred_check_branch
      %45 = sbr.rel (0) target = $region25
    $region24: #{_adjoint_matvec.1} parent=1 // pred_region
      %46 = dma.done [#allocation5], 2048
    $region25: #{_adjoint_matvec.1} parent=1 // pred_fallthru
      _
    %v47 = vld [vmem:[%s0] sm:$0xff]
    %v48 = vld [vmem:[%s1] sm:$0xff]
    %v49 = vld [vmem:[#allocation2] sm:$0xff]
    %v50 = vld [vmem:[#allocation2 + $0x8] sm:$0xff]
    %v51 = vld [vmem:[#allocation2 + $0x10] sm:$0xff]
    %v52 = vld [vmem:[#allocation2 + $0x18] sm:$0xff]
    %v53 = vld [vmem:[#allocation2 + $0x20] sm:$0xff]
    %v54 = vld [vmem:[#allocation2 + $0x28] sm:$0xff]
    %v55 = vld [vmem:[#allocation2 + $0x30] sm:$0xff]
    %v56 = vld [vmem:[#allocation2 + $0x38] sm:$0xff]
    %v57 = vld [vmem:[#allocation2 + $0x40] sm:$0xff]
    %v58 = vld [vmem:[#allocation2 + $0x48] sm:$0xff]
    %v59 = vld [vmem:[#allocation2 + $0x50] sm:$0xff]
    %v60 = vld [vmem:[#allocation2 + $0x58] sm:$0xff]
    %v61 = vld [vmem:[#allocation2 + $0x60] sm:$0xff]
    %v62 = vld [vmem:[#allocation2 + $0x68] sm:$0xff]
    %v63 = vld [vmem:[#allocation2 + $0x70] sm:$0xff]
    %v64 = vld [vmem:[#allocation2 + $0x78] sm:$0xff]
    %v65 = vld [vmem:[#allocation4] sm:$0xff]
    %v66 = vld [vmem:[#allocation4 + $0x8] sm:$0xff]
    %v67 = vld [vmem:[#allocation4 + $0x10] sm:$0xff]
    %v68 = vld [vmem:[#allocation4 + $0x18] sm:$0xff]
    %v69 = vld [vmem:[#allocation4 + $0x20] sm:$0xff]
    %v70 = vld [vmem:[#allocation4 + $0x28] sm:$0xff]
    %v71 = vld [vmem:[#allocation4 + $0x30] sm:$0xff]
    %v72 = vld [vmem:[#allocation4 + $0x38] sm:$0xff]
    %v73 = vld [vmem:[#allocation4 + $0x40] sm:$0xff]
    %v74 = vld [vmem:[#allocation4 + $0x48] sm:$0xff]
    %v75 = vld [vmem:[#allocation4 + $0x50] sm:$0xff]
    %v76 = vld [vmem:[#allocation4 + $0x58] sm:$0xff]
    %v77 = vld [vmem:[#allocation4 + $0x60] sm:$0xff]
    %v78 = vld [vmem:[#allocation4 + $0x68] sm:$0xff]
    %v79 = vld [vmem:[#allocation4 + $0x70] sm:$0xff]
    %v80 = vld [vmem:[#allocation4 + $0x78] sm:$0xff]
    %81 = vmatprep.subr.mxu0 0.0
    %82 = vmatpush1.msra.mxu0 %v80
    %83 = vmatprep.subr.mxu0 0.0
    %84 = vmatpush1.msra.mxu0 %v79
    %85 = vmatprep.subr.mxu0 0.0
    %86 = vmatpush1.msra.mxu0 %v78
    %87 = vmatprep.subr.mxu0 0.0
    %88 = vmatpush1.msra.mxu0 %v77
    %89 = vmatprep.subr.mxu0 0.0
    %90 = vmatpush1.msra.mxu0 %v76
    %91 = vmatprep.subr.mxu0 0.0
    %92 = vmatpush1.msra.mxu0 %v75
    %93 = vmatprep.subr.mxu0 0.0
    %94 = vmatpush1.msra.mxu0 %v74
    %95 = vmatprep.subr.mxu0 0.0
    %96 = vmatpush1.msra.mxu0 %v73
    %97 = vmatprep.subr.mxu0 0.0
    %98 = vmatpush1.msra.mxu0 %v72
    %99 = vmatprep.subr.mxu0 0.0
    %100 = vmatpush1.msra.mxu0 %v71
    %101 = vmatprep.subr.mxu0 0.0
    %102 = vmatpush1.msra.mxu0 %v70
    %103 = vmatprep.subr.mxu0 0.0
    %104 = vmatpush1.msra.mxu0 %v69
    %105 = vmatprep.subr.mxu0 0.0
    %106 = vmatpush1.msra.mxu0 %v68
    %107 = vmatprep.subr.mxu0 0.0
    %108 = vmatpush1.msra.mxu0 %v67
    %109 = vmatprep.subr.mxu0 0.0
    %110 = vmatpush1.msra.mxu0 %v66
    %111 = vmatprep.subr.mxu0 0.0
    %112 = vmatpush1.msra.mxu0 %v65
    %113 = vmatprep.subr.mxu0 0.0
    %114 = vmatpush2.msra.mxu0 0.0
    %115 = vmatprep.subr.mxu0 0.0
    %116 = vmatpush2.msra.mxu0 0.0
    %117 = vmatprep.subr.mxu0 0.0
    %118 = vmatpush2.msra.mxu0 0.0
    %119 = vmatprep.subr.mxu0 0.0
    %120 = vmatpush2.msra.mxu0 0.0
    %121 = vmatprep.subr.mxu0 0.0
    %122 = vmatpush2.msra.mxu0 0.0
    %123 = vmatprep.subr.mxu0 0.0
    %124 = vmatpush2.msra.mxu0 0.0
    %125 = vmatprep.subr.mxu0 0.0
    %126 = vmatpush2.msra.mxu0 0.0
    %127 = vmatprep.subr.mxu0 0.0
    %128 = vmatpush2.msra.mxu0 0.0
    %129 = vmatprep.subr.mxu0 0.0
    %130 = vmatpush2.msra.mxu0 0.0
    %131 = vmatprep.subr.mxu0 0.0
    %132 = vmatpush2.msra.mxu0 0.0
    %133 = vmatprep.subr.mxu0 0.0
    %134 = vmatpush2.msra.mxu0 0.0
    %135 = vmatprep.subr.mxu0 0.0
    %136 = vmatpush2.msra.mxu0 0.0
    %137 = vmatprep.subr.mxu0 0.0
    %138 = vmatpush2.msra.mxu0 0.0
    %139 = vmatprep.subr.mxu0 0.0
    %140 = vmatpush2.msra.mxu0 0.0
    %141 = vmatprep.subr.mxu0 0.0
    %142 = vmatpush2.msra.mxu0 0.0
    %143 = vmatprep.subr.mxu0 0.0
    %144 = vmatpush2.msra.mxu0 0.0
    %145 = vmatprep.mubr.f32.mxu0 0.0
    %146 = vmatmul.mubr.f32.gmra.mxu0 %v48
    %v147 = vpop.f32.mrf.mxu0
    %v148 = vadd.f32 0.0, %v147
    %v149 = vpop.f32.mrf.mxu0
    %150 = vdwg.mxu0
    %151 = vmatprep.subr.mxu0 0.0
    %152 = vmatpush1.msra.mxu0 %v64
    %153 = vmatprep.subr.mxu0 0.0
    %154 = vmatpush1.msra.mxu0 %v63
    %155 = vmatprep.subr.mxu0 0.0
    %156 = vmatpush1.msra.mxu0 %v62
    %157 = vmatprep.subr.mxu0 0.0
    %158 = vmatpush1.msra.mxu0 %v61
    %159 = vmatprep.subr.mxu0 0.0
    %160 = vmatpush1.msra.mxu0 %v60
    %161 = vmatprep.subr.mxu0 0.0
    %162 = vmatpush1.msra.mxu0 %v59
    %163 = vmatprep.subr.mxu0 0.0
    %164 = vmatpush1.msra.mxu0 %v58
    %165 = vmatprep.subr.mxu0 0.0
    %166 = vmatpush1.msra.mxu0 %v57
    %167 = vmatprep.subr.mxu0 0.0
    %168 = vmatpush1.msra.mxu0 %v56
    %169 = vmatprep.subr.mxu0 0.0
    %170 = vmatpush1.msra.mxu0 %v55
    %171 = vmatprep.subr.mxu0 0.0
    %172 = vmatpush1.msra.mxu0 %v54
    %173 = vmatprep.subr.mxu0 0.0
    %174 = vmatpush1.msra.mxu0 %v53
    %175 = vmatprep.subr.mxu0 0.0
    %176 = vmatpush1.msra.mxu0 %v52
    %177 = vmatprep.subr.mxu0 0.0
    %178 = vmatpush1.msra.mxu0 %v51
    %179 = vmatprep.subr.mxu0 0.0
    %180 = vmatpush1.msra.mxu0 %v50
    %181 = vmatprep.subr.mxu0 0.0
    %182 = vmatpush1.msra.mxu0 %v49
    %183 = vmatprep.subr.mxu0 0.0
    %184 = vmatpush2.msra.mxu0 0.0
    %185 = vmatprep.subr.mxu0 0.0
    %186 = vmatpush2.msra.mxu0 0.0
    %187 = vmatprep.subr.mxu0 0.0
    %188 = vmatpush2.msra.mxu0 0.0
    %189 = vmatprep.subr.mxu0 0.0
    %190 = vmatpush2.msra.mxu0 0.0
    %191 = vmatprep.subr.mxu0 0.0
    %192 = vmatpush2.msra.mxu0 0.0
    %193 = vmatprep.subr.mxu0 0.0
    %194 = vmatpush2.msra.mxu0 0.0
    %195 = vmatprep.subr.mxu0 0.0
    %196 = vmatpush2.msra.mxu0 0.0
    %197 = vmatprep.subr.mxu0 0.0
    %198 = vmatpush2.msra.mxu0 0.0
    %199 = vmatprep.subr.mxu0 0.0
    %200 = vmatpush2.msra.mxu0 0.0
    %201 = vmatprep.subr.mxu0 0.0
    %202 = vmatpush2.msra.mxu0 0.0
    %203 = vmatprep.subr.mxu0 0.0
    %204 = vmatpush2.msra.mxu0 0.0
    %205 = vmatprep.subr.mxu0 0.0
    %206 = vmatpush2.msra.mxu0 0.0
    %207 = vmatprep.subr.mxu0 0.0
    %208 = vmatpush2.msra.mxu0 0.0
    %209 = vmatprep.subr.mxu0 0.0
    %210 = vmatpush2.msra.mxu0 0.0
    %211 = vmatprep.subr.mxu0 0.0
    %212 = vmatpush2.msra.mxu0 0.0
    %213 = vmatprep.subr.mxu0 0.0
    %214 = vmatpush2.msra.mxu0 0.0
    %215 = vmatprep.mubr.f32.mxu0 0.0
    %216 = vmatmul.mubr.f32.gmra.mxu0 %v47
    %v217 = vpop.f32.mrf.mxu0
    %v218 = vadd.f32 %v148, %v217
    %v219 = vpop.f32.mrf.mxu0
    %220 = vdwg.mxu0
    %221 = vst [vmem:[%s4] sm:$0xff] %v218
    %222 = vmatprep.subr.mxu0 0.0
    %223 = vmatpush1.msra.mxu0 %v64
    %224 = vmatprep.subr.mxu0 0.0
    %225 = vmatpush1.msra.mxu0 %v63
    %226 = vmatprep.subr.mxu0 0.0
    %227 = vmatpush1.msra.mxu0 %v62
    %228 = vmatprep.subr.mxu0 0.0
    %229 = vmatpush1.msra.mxu0 %v61
    %230 = vmatprep.subr.mxu0 0.0
    %231 = vmatpush1.msra.mxu0 %v60
    %232 = vmatprep.subr.mxu0 0.0
    %233 = vmatpush1.msra.mxu0 %v59
    %234 = vmatprep.subr.mxu0 0.0
    %235 = vmatpush1.msra.mxu0 %v58
    %236 = vmatprep.subr.mxu0 0.0
    %237 = vmatpush1.msra.mxu0 %v57
    %238 = vmatprep.subr.mxu0 0.0
    %239 = vmatpush1.msra.mxu0 %v56
    %240 = vmatprep.subr.mxu0 0.0
    %241 = vmatpush1.msra.mxu0 %v55
    %242 = vmatprep.subr.mxu0 0.0
    %243 = vmatpush1.msra.mxu0 %v54
    %244 = vmatprep.subr.mxu0 0.0
    %245 = vmatpush1.msra.mxu0 %v53
    %246 = vmatprep.subr.mxu0 0.0
    %247 = vmatpush1.msra.mxu0 %v52
    %248 = vmatprep.subr.mxu0 0.0
    %249 = vmatpush1.msra.mxu0 %v51
    %250 = vmatprep.subr.mxu0 0.0
    %251 = vmatpush1.msra.mxu0 %v50
    %252 = vmatprep.subr.mxu0 0.0
    %253 = vmatpush1.msra.mxu0 %v49
    %254 = vmatprep.subr.mxu0 0.0
    %255 = vmatpush2.msra.mxu0 0.0
    %256 = vmatprep.subr.mxu0 0.0
    %257 = vmatpush2.msra.mxu0 0.0
    %258 = vmatprep.subr.mxu0 0.0
    %259 = vmatpush2.msra.mxu0 0.0
    %260 = vmatprep.subr.mxu0 0.0
    %261 = vmatpush2.msra.mxu0 0.0
    %262 = vmatprep.subr.mxu0 0.0
    %263 = vmatpush2.msra.mxu0 0.0
    %264 = vmatprep.subr.mxu0 0.0
    %265 = vmatpush2.msra.mxu0 0.0
    %266 = vmatprep.subr.mxu0 0.0
    %267 = vmatpush2.msra.mxu0 0.0
    %268 = vmatprep.subr.mxu0 0.0
    %269 = vmatpush2.msra.mxu0 0.0
    %270 = vmatprep.subr.mxu0 0.0
    %271 = vmatpush2.msra.mxu0 0.0
    %272 = vmatprep.subr.mxu0 0.0
    %273 = vmatpush2.msra.mxu0 0.0
    %274 = vmatprep.subr.mxu0 0.0
    %275 = vmatpush2.msra.mxu0 0.0
    %276 = vmatprep.subr.mxu0 0.0
    %277 = vmatpush2.msra.mxu0 0.0
    %278 = vmatprep.subr.mxu0 0.0
    %279 = vmatpush2.msra.mxu0 0.0
    %280 = vmatprep.subr.mxu0 0.0
    %281 = vmatpush2.msra.mxu0 0.0
    %282 = vmatprep.subr.mxu0 0.0
    %283 = vmatpush2.msra.mxu0 0.0
    %284 = vmatprep.subr.mxu0 0.0
    %285 = vmatpush2.msra.mxu0 0.0
    %286 = vmatprep.mubr.f32.mxu0 0.0
    %287 = vmatmul.mubr.f32.gmra.mxu0 %v48
    %v288 = vpop.f32.mrf.mxu0
    %v289 = vadd.f32 0.0, %v288
    %v290 = vpop.f32.mrf.mxu0
    %291 = vdwg.mxu0
    %292 = vmatprep.subr.mxu0 0.0
    %293 = vmatpush1.msra.mxu0 %v80
    %294 = vmatprep.subr.mxu0 0.0
    %295 = vmatpush1.msra.mxu0 %v79
    %296 = vmatprep.subr.mxu0 0.0
    %297 = vmatpush1.msra.mxu0 %v78
    %298 = vmatprep.subr.mxu0 0.0
    %299 = vmatpush1.msra.mxu0 %v77
    %300 = vmatprep.subr.mxu0 0.0
    %301 = vmatpush1.msra.mxu0 %v76
    %302 = vmatprep.subr.mxu0 0.0
    %303 = vmatpush1.msra.mxu0 %v75
    %304 = vmatprep.subr.mxu0 0.0
    %305 = vmatpush1.msra.mxu0 %v74
    %306 = vmatprep.subr.mxu0 0.0
    %307 = vmatpush1.msra.mxu0 %v73
    %308 = vmatprep.subr.mxu0 0.0
    %309 = vmatpush1.msra.mxu0 %v72
    %310 = vmatprep.subr.mxu0 0.0
    %311 = vmatpush1.msra.mxu0 %v71
    %312 = vmatprep.subr.mxu0 0.0
    %313 = vmatpush1.msra.mxu0 %v70
    %314 = vmatprep.subr.mxu0 0.0
    %315 = vmatpush1.msra.mxu0 %v69
    %316 = vmatprep.subr.mxu0 0.0
    %317 = vmatpush1.msra.mxu0 %v68
    %318 = vmatprep.subr.mxu0 0.0
    %319 = vmatpush1.msra.mxu0 %v67
    %320 = vmatprep.subr.mxu0 0.0
    %321 = vmatpush1.msra.mxu0 %v66
    %322 = vmatprep.subr.mxu0 0.0
    %323 = vmatpush1.msra.mxu0 %v65
    %324 = vmatprep.subr.mxu0 0.0
    %325 = vmatpush2.msra.mxu0 0.0
    %326 = vmatprep.subr.mxu0 0.0
    %327 = vmatpush2.msra.mxu0 0.0
    %328 = vmatprep.subr.mxu0 0.0
    %329 = vmatpush2.msra.mxu0 0.0
    %330 = vmatprep.subr.mxu0 0.0
    %331 = vmatpush2.msra.mxu0 0.0
    %332 = vmatprep.subr.mxu0 0.0
    %333 = vmatpush2.msra.mxu0 0.0
    %334 = vmatprep.subr.mxu0 0.0
    %335 = vmatpush2.msra.mxu0 0.0
    %336 = vmatprep.subr.mxu0 0.0
    %337 = vmatpush2.msra.mxu0 0.0
    %338 = vmatprep.subr.mxu0 0.0
    %339 = vmatpush2.msra.mxu0 0.0
    %340 = vmatprep.subr.mxu0 0.0
    %341 = vmatpush2.msra.mxu0 0.0
    %342 = vmatprep.subr.mxu0 0.0
    %343 = vmatpush2.msra.mxu0 0.0
    %344 = vmatprep.subr.mxu0 0.0
    %345 = vmatpush2.msra.mxu0 0.0
    %346 = vmatprep.subr.mxu0 0.0
    %347 = vmatpush2.msra.mxu0 0.0
    %348 = vmatprep.subr.mxu0 0.0
    %349 = vmatpush2.msra.mxu0 0.0
    %350 = vmatprep.subr.mxu0 0.0
    %351 = vmatpush2.msra.mxu0 0.0
    %352 = vmatprep.subr.mxu0 0.0
    %353 = vmatpush2.msra.mxu0 0.0
    %354 = vmatprep.subr.mxu0 0.0
    %355 = vmatpush2.msra.mxu0 0.0
    %356 = vmatprep.mubr.f32.mxu0 0.0
    %357 = vmatmul.mubr.f32.gmra.mxu0 %v47
    %v358 = vpop.f32.mrf.mxu0
    %v359 = vadd.f32 0.0, %v358
    %v360 = vpop.f32.mrf.mxu0
    %361 = vdwg.mxu0
    %v362 = vsub.f32 %v289, %v359
    %363 = vst [vmem:[%s5] sm:$0xff] %v362
    // Predicated region
    $region26: #{_adjoint_matvec.1} parent=1 // pred_check
      _
    $region27: #{_adjoint_matvec.1} parent=1 // pred_check_branch
      %365 = sbr.rel (0) target = $region29
    $region28: #{_adjoint_matvec.1} parent=1 // pred_region
      _
    $region29: #{_adjoint_matvec.1} parent=1 // pred_fallthru
      _
    // Predicated region
    $region30: #{_adjoint_matvec.1} parent=1 // pred_check
      _
    $region31: #{_adjoint_matvec.1} parent=1 // pred_check_branch
      %367 = sbr.rel (0) target = $region33
    $region32: #{_adjoint_matvec.1} parent=1 // pred_region
      _
    $region33: #{_adjoint_matvec.1} parent=1 // pred_fallthru
      _
    // Predicated region
    $region34: #{_adjoint_matvec.1} parent=1 // pred_check
      _
    $region35: #{_adjoint_matvec.1} parent=1 // pred_check_branch
      %369 = sbr.rel (0) target = $region37
    $region36: #{_adjoint_matvec.1} parent=1 // pred_region
      _
    $region37: #{_adjoint_matvec.1} parent=1 // pred_fallthru
      _
    // Predicated region
    $region38: #{_adjoint_matvec.1} parent=1 // pred_check
      _
    $region39: #{_adjoint_matvec.1} parent=1 // pred_check_branch
      %371 = sbr.rel (0) target = $region41
    $region40: #{_adjoint_matvec.1} parent=1 // pred_region
      _
    $region41: #{_adjoint_matvec.1} parent=1 // pred_fallthru
      _
    %372 = vsyncpa [#allocation3], 1
    %373 = vsyncpa [#allocation5], 1

</llo_original>
